<compile_context>
chip_gen: v7x
topology: tpu7x:2x2x1
jax: 0.10.0
libtpu: 0.0.40
codegen_flags: <defaults>
</compile_context>

<pallas_src>
import jax
import jax.numpy as jnp
from jax.experimental import pallas as pl
from jax.experimental.pallas import tpu as pltpu

TEMPERATURE = 0.5  # MultiLayerFeatureFusion.temperature


def _make_kernel(num_layers, batch):
    L, B = num_layers, batch
    two_b = 2 * B

    def kernel(*refs):
        # refs: L student [B,D], L teacher [B,D], w1 [D,H], b1 [1,H],
        #       w2_row [1,H] (pre-scaled by 1/T), b2 (1,1) SMEM (pre-scaled),
        #       out (1,1) SMEM.
        feat_refs = refs[: 2 * L]
        w1_ref, b1_ref, w2_ref, b2_ref, out_ref = refs[2 * L:]

        # Per-layer [2B, D] blocks: rows [0:B] = student, [B:2B] = teacher.
        x_layers = [
            jnp.concatenate([feat_refs[l][...], feat_refs[L + l][...]], axis=0)
            for l in range(L)
        ]
        x = jnp.concatenate(x_layers, axis=0)                         # [L*2B, D]

        # One MXU push for the first attention Linear; tanh on the EUP.
        h = jnp.tanh(
            jnp.dot(x, w1_ref[...], preferred_element_type=jnp.float32)
            + b1_ref[...])                                            # [L*2B, H]

        # Second (H -> 1) projection on the VPU + lane reduce.  Temperature is
        # already folded into w2_row / b2 by the wrapper, so these *are* the
        # scaled softmax logits.
        scores = (jnp.sum(h * w2_ref[...], axis=-1, keepdims=True)
                  + b2_ref[0, 0])                                     # [L*2B, 1]

        sc = [scores[l * two_b:(l + 1) * two_b] for l in range(L)]    # L x [2B,1]

        # softmax over layers, elementwise across the L score vectors.
        m = sc[0]
        for l in range(1, L):
            m = jnp.maximum(m, sc[l])
        e = [jnp.exp(s - m) for s in sc]
        denom = e[0]
        for l in range(1, L):
            denom = denom + e[l]
        inv = pl.reciprocal(denom, approx=True)                       # [2B, 1]

        # fused = sum_l softmax_l * x_l   (student rows and teacher rows share
        # their own softmax weights since scores were computed per row).
        fused = (e[0] * inv) * x_layers[0]
        for l in range(1, L):
            fused = fused + (e[l] * inv) * x_layers[l]                # [2B, D]

        # MSE(student_fused, teacher_fused).  Teacher detach only matters under
        # autodiff; forward value is identical (see TODO below).
        diff = fused[:B] - fused[B:]                                  # [B, D]
        out_ref[0, 0] = jnp.sum(diff * diff) * (1.0 / diff.size)

    return kernel


def fusion_distiller_loss(student_feats, teacher_feats, params):
    """student_feats / teacher_feats: lists of L arrays of shape [B, D] (f32)."""
    w1, b1, w2, b2 = params
    L = len(student_feats)
    B, D = student_feats[0].shape
    H = w1.shape[1]

    # Fold the softmax temperature into the second attention Linear.
    w2_row = (jnp.reshape(w2, (1, H)) / TEMPERATURE).astype(jnp.float32)
    b2_s = (jnp.reshape(b2, (1, 1)) / TEMPERATURE).astype(jnp.float32)

    vmem = pl.BlockSpec(memory_space=pltpu.MemorySpace.VMEM)
    smem = pl.BlockSpec(memory_space=pltpu.MemorySpace.SMEM)

    out = pl.pallas_call(
        _make_kernel(L, B),
        out_shape=jax.ShapeDtypeStruct((1, 1), jnp.float32),
        in_specs=[vmem] * (2 * L) + [vmem, vmem, vmem, smem],
        out_specs=smem,
    )(*student_feats, *teacher_feats, w1, b1, w2_row, b2_s)
    return out[0, 0]


def reference_loss(student_feats, teacher_feats, params):
    """Pure-JAX reference of FusionDistiller.forward (attention fuse + mse)."""
    w1, b1, w2, b2 = params

    def fuse(feats):
        x = jnp.stack(feats, axis=1).astype(jnp.float32)              # [B, L, D]
        h = jnp.tanh(x @ w1 + b1)                                     # [B, L, H]
        scores = (h @ w2)[..., 0] + b2[0, 0]                          # [B, L]
        w = jax.nn.softmax(scores / TEMPERATURE, axis=-1)
        return jnp.sum(w[:, :, None] * x, axis=1)                     # [B, D]

    s = fuse(student_feats)
    t = fuse(teacher_feats)
    return jnp.mean((s - t) ** 2)


if __name__ == "__main__":
    # Small shapes consistent with the module: L layers of [B, D] features.
    B, L, D, H = 8, 3, 128, 32

    key = jax.random.PRNGKey(0)
    ks = jax.random.split(key, 2 * L + 4)
    student_feats = [jax.random.normal(ks[i], (B, D), jnp.float32) for i in range(L)]
    teacher_feats = [jax.random.normal(ks[L + i], (B, D), jnp.float32) for i in range(L)]

    # Deterministic parameter init (PyTorch-Linear-style uniform bounds).
    lim1 = 1.0 / (D ** 0.5)
    lim2 = 1.0 / (H ** 0.5)
    w1 = jax.random.uniform(ks[2 * L + 0], (D, H), jnp.float32, -lim1, lim1)
    b1 = jax.random.uniform(ks[2 * L + 1], (1, H), jnp.float32, -lim1, lim1)
    w2 = jax.random.uniform(ks[2 * L + 2], (H, 1), jnp.float32, -lim2, lim2)
    b2 = jax.random.uniform(ks[2 * L + 3], (1, 1), jnp.float32, -lim2, lim2)
    params = (w1, b1, w2, b2)

    loss = fusion_distiller_loss(student_feats, teacher_feats, params)
    loss = jax.block_until_ready(loss)

    ref = reference_loss(student_feats, teacher_feats, params)
    assert jnp.allclose(loss, ref, rtol=2e-3, atol=2e-5), (float(loss), float(ref))

    # TODO(synk): 'w_distance' (geomloss Sinkhorn) and 'cosine' loss variants are
    # not implemented (default 'mse' path only); dropout is inactive in the
    # attention fuse_mode; teacher .detach() is a gradient-only semantic — add
    # stop_gradient / custom VJP if this is ever wrapped in jax.grad.
    print("KERNEL_OK")
</pallas_src>

<mosaic_0001>
module attributes {stable_mosaic.version = 11 : i64} {
  func.func @kernel(%arg0: memref<8x128xf32, #tpu.memory_space<vmem>>, %arg1: memref<8x128xf32, #tpu.memory_space<vmem>>, %arg2: memref<8x128xf32, #tpu.memory_space<vmem>>, %arg3: memref<8x128xf32, #tpu.memory_space<vmem>>, %arg4: memref<8x128xf32, #tpu.memory_space<vmem>>, %arg5: memref<8x128xf32, #tpu.memory_space<vmem>>, %arg6: memref<128x32xf32, #tpu.memory_space<vmem>>, %arg7: memref<1x32xf32, #tpu.memory_space<vmem>>, %arg8: memref<1x32xf32, #tpu.memory_space<vmem>>, %arg9: memref<1x1xf32, #tpu.memory_space<smem>>, %arg10: memref<1x1xf32, #tpu.memory_space<smem>>) attributes {dimension_semantics = [], scalar_prefetch = 0 : i64, scratch_operands = 0 : i64, tpu.core_type = #tpu.core_type<tc>} {
    %c0 = arith.constant 0 : index
    %c0_0 = arith.constant 0 : index
    %0 = vector.load %arg0[%c0, %c0_0] : memref<8x128xf32, #tpu.memory_space<vmem>>, vector<8x128xf32>
    %c0_1 = arith.constant 0 : index
    %c0_2 = arith.constant 0 : index
    %1 = vector.load %arg3[%c0_1, %c0_2] : memref<8x128xf32, #tpu.memory_space<vmem>>, vector<8x128xf32>
    %2 = tpu.concatenate %0, %1 in 0 : vector<8x128xf32>, vector<8x128xf32> -> vector<16x128xf32>
    %c0_3 = arith.constant 0 : index
    %c0_4 = arith.constant 0 : index
    %3 = vector.load %arg1[%c0_3, %c0_4] : memref<8x128xf32, #tpu.memory_space<vmem>>, vector<8x128xf32>
    %c0_5 = arith.constant 0 : index
    %c0_6 = arith.constant 0 : index
    %4 = vector.load %arg4[%c0_5, %c0_6] : memref<8x128xf32, #tpu.memory_space<vmem>>, vector<8x128xf32>
    %5 = tpu.concatenate %3, %4 in 0 : vector<8x128xf32>, vector<8x128xf32> -> vector<16x128xf32>
    %c0_7 = arith.constant 0 : index
    %c0_8 = arith.constant 0 : index
    %6 = vector.load %arg2[%c0_7, %c0_8] : memref<8x128xf32, #tpu.memory_space<vmem>>, vector<8x128xf32>
    %c0_9 = arith.constant 0 : index
    %c0_10 = arith.constant 0 : index
    %7 = vector.load %arg5[%c0_9, %c0_10] : memref<8x128xf32, #tpu.memory_space<vmem>>, vector<8x128xf32>
    %8 = tpu.concatenate %6, %7 in 0 : vector<8x128xf32>, vector<8x128xf32> -> vector<16x128xf32>
    %9 = tpu.concatenate %2, %5, %8 in 0 : vector<16x128xf32>, vector<16x128xf32>, vector<16x128xf32> -> vector<48x128xf32>
    %c0_11 = arith.constant 0 : index
    %c0_12 = arith.constant 0 : index
    %10 = vector.load %arg6[%c0_11, %c0_12] : memref<128x32xf32, #tpu.memory_space<vmem>>, vector<128x32xf32>
    %cst = arith.constant dense<0.000000e+00> : vector<48x32xf32>
    %11 = tpu.matmul %9, %10, %cst {dimension_numbers = #tpu.dot_dimension_numbers<[1], [0], [0], [1], [0, 0, 1, 1], [], []>} : vector<48x128xf32>, vector<128x32xf32>, vector<48x32xf32> -> vector<48x32xf32>
    %c0_13 = arith.constant 0 : index
    %c0_14 = arith.constant 0 : index
    %12 = vector.load %arg7[%c0_13, %c0_14] : memref<1x32xf32, #tpu.memory_space<vmem>>, vector<1x32xf32>
    %13 = vector.broadcast %12 : vector<1x32xf32> to vector<48x32xf32>
    %14 = arith.addf %11, %13 : vector<48x32xf32>
    %15 = math.tanh %14 : vector<48x32xf32>
    %c0_15 = arith.constant 0 : index
    %c0_16 = arith.constant 0 : index
    %16 = vector.load %arg8[%c0_15, %c0_16] : memref<1x32xf32, #tpu.memory_space<vmem>>, vector<1x32xf32>
    %17 = vector.broadcast %16 : vector<1x32xf32> to vector<48x32xf32>
    %18 = arith.mulf %15, %17 : vector<48x32xf32>
    %cst_17 = arith.constant dense<0.000000e+00> : vector<48xf32>
    %19 = vector.multi_reduction <add>, %18, %cst_17 [1] : vector<48x32xf32> to vector<48xf32>
    %20 = vector.shape_cast %19 : vector<48xf32> to vector<48x1xf32>
    %c0_18 = arith.constant 0 : index
    %c0_19 = arith.constant 0 : index
    %21 = memref.load %arg9[%c0_18, %c0_19] : memref<1x1xf32, #tpu.memory_space<smem>>
    %22 = vector.broadcast %21 : f32 to vector<48x1xf32>
    %23 = arith.addf %20, %22 : vector<48x1xf32>
    %24 = vector.extract_strided_slice %23 {offsets = [0, 0], sizes = [16, 1], strides = [1, 1]} : vector<48x1xf32> to vector<16x1xf32>
    %25 = vector.extract_strided_slice %23 {offsets = [16, 0], sizes = [16, 1], strides = [1, 1]} : vector<48x1xf32> to vector<16x1xf32>
    %26 = vector.extract_strided_slice %23 {offsets = [32, 0], sizes = [16, 1], strides = [1, 1]} : vector<48x1xf32> to vector<16x1xf32>
    %27 = arith.maximumf %24, %25 : vector<16x1xf32>
    %28 = arith.maximumf %27, %26 : vector<16x1xf32>
    %29 = arith.subf %24, %28 : vector<16x1xf32>
    %30 = math.exp %29 : vector<16x1xf32>
    %31 = arith.subf %25, %28 : vector<16x1xf32>
    %32 = math.exp %31 : vector<16x1xf32>
    %33 = arith.subf %26, %28 : vector<16x1xf32>
    %34 = math.exp %33 : vector<16x1xf32>
    %35 = arith.addf %30, %32 : vector<16x1xf32>
    %36 = arith.addf %35, %34 : vector<16x1xf32>
    %37 = tpu.reciprocal %36 {approx = true} : vector<16x1xf32> -> vector<16x1xf32>
    %38 = arith.mulf %30, %37 : vector<16x1xf32>
    %39 = vector.broadcast %38 : vector<16x1xf32> to vector<16x128xf32>
    %40 = arith.mulf %39, %2 : vector<16x128xf32>
    %41 = arith.mulf %32, %37 : vector<16x1xf32>
    %42 = vector.broadcast %41 : vector<16x1xf32> to vector<16x128xf32>
    %43 = arith.mulf %42, %5 : vector<16x128xf32>
    %44 = arith.addf %40, %43 : vector<16x128xf32>
    %45 = arith.mulf %34, %37 : vector<16x1xf32>
    %46 = vector.broadcast %45 : vector<16x1xf32> to vector<16x128xf32>
    %47 = arith.mulf %46, %8 : vector<16x128xf32>
    %48 = arith.addf %44, %47 : vector<16x128xf32>
    %49 = vector.extract_strided_slice %48 {offsets = [0, 0], sizes = [8, 128], strides = [1, 1]} : vector<16x128xf32> to vector<8x128xf32>
    %50 = vector.extract_strided_slice %48 {offsets = [8, 0], sizes = [8, 128], strides = [1, 1]} : vector<16x128xf32> to vector<8x128xf32>
    %51 = arith.subf %49, %50 : vector<8x128xf32>
    %52 = arith.mulf %51, %51 : vector<8x128xf32>
    %53 = vector.shape_cast %52 : vector<8x128xf32> to vector<1x8x128xf32>
    %cst_20 = arith.constant dense<0.000000e+00> : vector<1xf32>
    %54 = vector.multi_reduction <add>, %53, %cst_20 [1, 2] : vector<1x8x128xf32> to vector<1xf32>
    %55 = vector.shape_cast %54 : vector<1xf32> to vector<1x1x1xf32>
    %56 = vector.extract %55[0, 0, 0] : f32 from vector<1x1x1xf32>
    %cst_21 = arith.constant 9.765625E-4 : f32
    %57 = arith.mulf %56, %cst_21 : f32
    %c0_22 = arith.constant 0 : index
    %c0_23 = arith.constant 0 : index
    %58 = memref.load %arg10[%c0_22, %c0_23] : memref<1x1xf32, #tpu.memory_space<smem>>
    memref.store %57, %arg10[%c0_22, %c0_23] : memref<1x1xf32, #tpu.memory_space<smem>>
    return
  }
}

</mosaic_0001>

<llo_original>
// kernel: tpu_custom_call.1
$region0: #{tpu_custom_call.1}
  #allocation0 [shape = 'u32[]', space=smem, size = 0x4, offset = 0x4, fixed_abs, tag = 'smem constant byte address 0x4 - core index']
  #allocation1 [shape = 'u32[144,128]{1,0:T(1,128)}', space=vmem, size = 0x12000, scoped, tag = 'internal scratch']
  #allocation2 [shape = 'f32[1,1]{1,0:T(1,128)S(6)}', space=smem, size = 0x200, scoped, tag = 'scoped memory for tpu_custom_call.1']
  %s0 = inlined_call_operand.vmem [shape: f32[8,128], index: 0, kind: input, shape index: {}]
  %s1 = inlined_call_operand.vmem [shape: f32[8,128], index: 1, kind: input, shape index: {}]
  %s2 = inlined_call_operand.vmem [shape: f32[8,128], index: 2, kind: input, shape index: {}]
  %s3 = inlined_call_operand.vmem [shape: f32[8,128], index: 3, kind: input, shape index: {}]
  %s4 = inlined_call_operand.vmem [shape: f32[8,128], index: 4, kind: input, shape index: {}]
  %s5 = inlined_call_operand.vmem [shape: f32[8,128], index: 5, kind: input, shape index: {}]
  %s6 = inlined_call_operand.vmem [shape: f32[128,32], index: 6, kind: input, shape index: {}]
  %s7 = inlined_call_operand.vmem [shape: f32[1,32], index: 7, kind: input, shape index: {}]
  %s8 = inlined_call_operand.vmem [shape: f32[1,32], index: 8, kind: input, shape index: {}]
  %s9 = inlined_call_operand.<no memory space> [shape: f32[1,1], index: 9, kind: input, shape index: {}]
  %s10 = inlined_call_operand.hbm [shape: f32[1,1], index: 10, kind: output, shape index: {}]
  %s11 = sld [smem:[#allocation0]]
  $region50: #{tpu_custom_call.1} parent=0
    _
  %s13 = ssub.s32 1, %s11
  %s14 = scalar_select 0, %s13, %s11
  %15 = sst [smem:[#allocation2]] %s9
  $region1: #{tpu_custom_call.1} parent=0
    #allocation3 [shape = 'u8[512]{0}', space=smem, size = 0x200, scoped, tag = 'output window, operand 0, single buffered']
    #allocation4 [shape = 's32[1]{0}', space=sflag, size = 0x4, scoped, tag = 'scoped memory for tpu_custom_call.1']
    %16 = vsyncpa [#allocation4], 0
    // Predicated region
    $region2: #{tpu_custom_call.1} parent=1 // pred_check
      _
    $region3: #{tpu_custom_call.1} parent=1 // pred_check_branch
      %18 = sbr.rel (0) target = $region5
    $region4: #{tpu_custom_call.1} parent=1 // pred_region
      _
    $region5: #{tpu_custom_call.1} parent=1 // pred_fallthru
      _
    // Predicated region
    $region6: #{tpu_custom_call.1} parent=1 // pred_check
      _
    $region7: #{tpu_custom_call.1} parent=1 // pred_check_branch
      %20 = sbr.rel (0) target = $region9
    $region8: #{tpu_custom_call.1} parent=1 // pred_region
      _
    $region9: #{tpu_custom_call.1} parent=1 // pred_fallthru
      _
    // Predicated region
    $region10: #{tpu_custom_call.1} parent=1 // pred_check
      _
    $region11: #{tpu_custom_call.1} parent=1 // pred_check_branch
      %22 = sbr.rel (0) target = $region13
    $region12: #{tpu_custom_call.1} parent=1 // pred_region
      _
    $region13: #{tpu_custom_call.1} parent=1 // pred_fallthru
      _
    // Predicated region
    $region14: #{tpu_custom_call.1} parent=1 // pred_check
      _
    $region15: #{tpu_custom_call.1} parent=1 // pred_check_branch
      %24 = sbr.rel (0) target = $region17
    $region16: #{tpu_custom_call.1} parent=1 // pred_region
      _
    $region17: #{tpu_custom_call.1} parent=1 // pred_fallthru
      _
    // Predicated region
    $region18: #{tpu_custom_call.1} parent=1 // pred_check
      _
    $region19: #{tpu_custom_call.1} parent=1 // pred_check_branch
      %26 = sbr.rel (0) target = $region21
    $region20: #{tpu_custom_call.1} parent=1 // pred_region
      _
    $region21: #{tpu_custom_call.1} parent=1 // pred_fallthru
      _
    // Predicated region
    $region22: #{tpu_custom_call.1} parent=1 // pred_check
      _
    $region23: #{tpu_custom_call.1} parent=1 // pred_check_branch
      %28 = sbr.rel (0) target = $region25
    $region24: #{tpu_custom_call.1} parent=1 // pred_region
      _
    $region25: #{tpu_custom_call.1} parent=1 // pred_fallthru
      _
    // Predicated region
    $region26: #{tpu_custom_call.1} parent=1 // pred_check
      _
    $region27: #{tpu_custom_call.1} parent=1 // pred_check_branch
      %30 = sbr.rel (0) target = $region29
    $region28: #{tpu_custom_call.1} parent=1 // pred_region
      _
    $region29: #{tpu_custom_call.1} parent=1 // pred_fallthru
      _
    // Predicated region
    $region30: #{tpu_custom_call.1} parent=1 // pred_check
      _
    $region31: #{tpu_custom_call.1} parent=1 // pred_check_branch
      %32 = sbr.rel (0) target = $region33
    $region32: #{tpu_custom_call.1} parent=1 // pred_region
      _
    $region33: #{tpu_custom_call.1} parent=1 // pred_fallthru
      _
    // Predicated region
    $region34: #{tpu_custom_call.1} parent=1 // pred_check
      _
    $region35: #{tpu_custom_call.1} parent=1 // pred_check_branch
      %34 = sbr.rel (0) target = $region37
    $region36: #{tpu_custom_call.1} parent=1 // pred_region
      _
    $region37: #{tpu_custom_call.1} parent=1 // pred_fallthru
      _
    // Predicated region
    $region38: #{tpu_custom_call.1} parent=1 // pred_check
      _
    $region39: #{tpu_custom_call.1} parent=1 // pred_check_branch
      %36 = sbr.rel (0) target = $region41
    $region40: #{tpu_custom_call.1} parent=1 // pred_region
      _
    $region41: #{tpu_custom_call.1} parent=1 // pred_fallthru
      _
    %v37 = vld [vmem:[%s0] sm:$0xff]
    %v38 = vld [vmem:[%s3] sm:$0xff]
    %v39 = vld [vmem:[%s1] sm:$0xff]
    %v40 = vld [vmem:[%s4] sm:$0xff]
    %v41 = vld [vmem:[%s2] sm:$0xff]
    %v42 = vld [vmem:[%s5] sm:$0xff]
    %v43 = vld [vmem:[%s6] sm:$0xff]
    %v44 = vld [vmem:[%s6 + $0x8] sm:$0xff]
    %v45 = vld [vmem:[%s6 + $0x10] sm:$0xff]
    %v46 = vld [vmem:[%s6 + $0x18] sm:$0xff]
    %v47 = vld [vmem:[%s6 + $0x20] sm:$0xff]
    %v48 = vld [vmem:[%s6 + $0x28] sm:$0xff]
    %v49 = vld [vmem:[%s6 + $0x30] sm:$0xff]
    %v50 = vld [vmem:[%s6 + $0x38] sm:$0xff]
    %v51 = vld [vmem:[%s6 + $0x40] sm:$0xff]
    %v52 = vld [vmem:[%s6 + $0x48] sm:$0xff]
    %v53 = vld [vmem:[%s6 + $0x50] sm:$0xff]
    %v54 = vld [vmem:[%s6 + $0x58] sm:$0xff]
    %v55 = vld [vmem:[%s6 + $0x60] sm:$0xff]
    %v56 = vld [vmem:[%s6 + $0x68] sm:$0xff]
    %v57 = vld [vmem:[%s6 + $0x70] sm:$0xff]
    %v58 = vld [vmem:[%s6 + $0x78] sm:$0xff]
    %v59 = vld [vmem:[%s7] sm:$0x1]
    %v61 = vlaneseq
    %v62 = vshrl.u32 %v61, 7
    %v63 = vsub.s32 0, %v62
    %v64 = vrot.slane %v59, %v63
    %66 = vmatprep.subr.mxu0 0.0
    %67 = vmatpush1.msra.mxu0 %v43
    %68 = vmatprep.subr.mxu0 0.0
    %69 = vmatpush1.msra.mxu0 %v44
    %70 = vmatprep.subr.mxu0 0.0
    %71 = vmatpush1.msra.mxu0 %v45
    %72 = vmatprep.subr.mxu0 0.0
    %73 = vmatpush1.msra.mxu0 %v46
    %74 = vmatprep.subr.mxu0 0.0
    %75 = vmatpush1.msra.mxu0 %v47
    %76 = vmatprep.subr.mxu0 0.0
    %77 = vmatpush1.msra.mxu0 %v48
    %78 = vmatprep.subr.mxu0 0.0
    %79 = vmatpush1.msra.mxu0 %v49
    %80 = vmatprep.subr.mxu0 0.0
    %81 = vmatpush1.msra.mxu0 %v50
    %82 = vmatprep.subr.mxu0 0.0
    %83 = vmatpush1.msra.mxu0 %v51
    %84 = vmatprep.subr.mxu0 0.0
    %85 = vmatpush1.msra.mxu0 %v52
    %86 = vmatprep.subr.mxu0 0.0
    %87 = vmatpush1.msra.mxu0 %v53
    %88 = vmatprep.subr.mxu0 0.0
    %89 = vmatpush1.msra.mxu0 %v54
    %90 = vmatprep.subr.mxu0 0.0
    %91 = vmatpush1.msra.mxu0 %v55
    %92 = vmatprep.subr.mxu0 0.0
    %93 = vmatpush1.msra.mxu0 %v56
    %94 = vmatprep.subr.mxu0 0.0
    %95 = vmatpush1.msra.mxu0 %v57
    %96 = vmatprep.subr.mxu0 0.0
    %97 = vmatpush1.msra.mxu0 %v58
    %98 = vmatprep.subr.mxu0 0.0
    %99 = vmatpush1.msra.mxu0 0.0
    %100 = vmatprep.subr.mxu0 0.0
    %101 = vmatpush1.msra.mxu0 0.0
    %102 = vmatprep.subr.mxu0 0.0
    %103 = vmatpush1.msra.mxu0 0.0
    %104 = vmatprep.subr.mxu0 0.0
    %105 = vmatpush1.msra.mxu0 0.0
    %106 = vmatprep.subr.mxu0 0.0
    %107 = vmatpush1.msra.mxu0 0.0
    %108 = vmatprep.subr.mxu0 0.0
    %109 = vmatpush1.msra.mxu0 0.0
    %110 = vmatprep.subr.mxu0 0.0
    %111 = vmatpush1.msra.mxu0 0.0
    %112 = vmatprep.subr.mxu0 0.0
    %113 = vmatpush1.msra.mxu0 0.0
    %114 = vmatprep.subr.mxu0 0.0
    %115 = vmatpush1.msra.mxu0 0.0
    %116 = vmatprep.subr.mxu0 0.0
    %117 = vmatpush1.msra.mxu0 0.0
    %118 = vmatprep.subr.mxu0 0.0
    %119 = vmatpush1.msra.mxu0 0.0
    %120 = vmatprep.subr.mxu0 0.0
    %121 = vmatpush1.msra.mxu0 0.0
    %122 = vmatprep.subr.mxu0 0.0
    %123 = vmatpush1.msra.mxu0 0.0
    %124 = vmatprep.subr.mxu0 0.0
    %125 = vmatpush1.msra.mxu0 0.0
    %126 = vmatprep.subr.mxu0 0.0
    %127 = vmatpush1.msra.mxu0 0.0
    %128 = vmatprep.subr.mxu0 0.0
    %129 = vmatpush1.msra.mxu0 0.0
    %130 = vmatprep.mubr.f32.mxu0 0.0
    %131 = vmatmul.mubr.f32.gmra.mrb[0].mxu0 %v37
    %v132 = vpop.f32.mrb[0].mxu0
    %v133 = vadd.f32 %v64, %v132
    %v134 = vpop.f32.mrb[0].mxu0
    %135 = vmatprep.mubr.f32.mxu0 0.0
    %136 = vmatmul.mubr.f32.gmra.mrb[0].mxu0 %v38
    %v137 = vpop.f32.mrb[0].mxu0
    %v138 = vadd.f32 %v64, %v137
    %v139 = vpop.f32.mrb[0].mxu0
    %140 = vmatprep.mubr.f32.mxu0 0.0
    %141 = vmatmul.mubr.f32.gmra.mrb[0].mxu0 %v39
    %v142 = vpop.f32.mrb[0].mxu0
    %v143 = vadd.f32 %v64, %v142
    %v144 = vpop.f32.mrb[0].mxu0
    %145 = vmatprep.mubr.f32.mxu0 0.0
    %146 = vmatmul.mubr.f32.gmra.mrb[0].mxu0 %v40
    %v147 = vpop.f32.mrb[0].mxu0
    %v148 = vadd.f32 %v64, %v147
    %v149 = vpop.f32.mrb[0].mxu0
    %150 = vmatprep.mubr.f32.mxu0 0.0
    %151 = vmatmul.mubr.f32.gmra.mrb[0].mxu0 %v41
    %v152 = vpop.f32.mrb[0].mxu0
    %v153 = vadd.f32 %v64, %v152
    %v154 = vpop.f32.mrb[0].mxu0
    %155 = vmatprep.mubr.f32.mxu0 0.0
    %156 = vmatmul.mubr.f32.gmra.mrb[0].mxu0 %v42
    %v157 = vpop.f32.mrb[0].mxu0
    %v158 = vadd.f32 %v64, %v157
    %v159 = vpop.f32.mrb[0].mxu0
    %160 = vdwg.mxu0
    %v161 = vtanh.pop %v133
    %v162 = vtanh.pop %v138
    %v163 = vtanh.pop %v143
    %v164 = vtanh.pop %v148
    %v165 = vtanh.pop %v153
    %v166 = vtanh.pop %v158
    %v167 = vld [vmem:[%s8] sm:$0x1]
    %v169 = vlaneseq
    %v170 = vshrl.u32 %v169, 7
    %v171 = vsub.s32 0, %v170
    %v172 = vrot.slane %v167, %v171
    %v174 = vmul.f32 %v161, %v172
    %v175 = vmul.f32 %v162, %v172
    %v176 = vmul.f32 %v163, %v172
    %v177 = vmul.f32 %v164, %v172
    %v178 = vmul.f32 %v165, %v172
    %v179 = vmul.f32 %v166, %v172
    %vm180 = vcmask 261120
    %v181 = vsel %vm180, %v174, 0.0
    %182 = vadd.xlane.f32.xlu0 %v181
    %v183 = vpop.xlane.xlu0 %182
    %v184 = vsel %vm180, %v175, 0.0
    %185 = vadd.xlane.f32.xlu0 %v184
    %v186 = vpop.xlane.xlu0 %185
    %v187 = vsel %vm180, %v176, 0.0
    %188 = vadd.xlane.f32.xlu0 %v187
    %v189 = vpop.xlane.xlu0 %188
    %v190 = vsel %vm180, %v177, 0.0
    %191 = vadd.xlane.f32.xlu0 %v190
    %v192 = vpop.xlane.xlu0 %191
    %v193 = vsel %vm180, %v178, 0.0
    %194 = vadd.xlane.f32.xlu0 %v193
    %v195 = vpop.xlane.xlu0 %194
    %v196 = vsel %vm180, %v179, 0.0
    %197 = vadd.xlane.f32.xlu0 %v196
    %v198 = vpop.xlane.xlu0 %197
    %s199 = sld [smem:[#allocation2]]
    %v200 = vstv %s199
    %v201 = vadd.f32 %v183, %v200
    %v202 = vadd.f32 %v186, %v200
    %v203 = vadd.f32 %v189, %v200
    %v204 = vadd.f32 %v192, %v200
    %v205 = vadd.f32 %v195, %v200
    %v206 = vadd.f32 %v198, %v200
    %v207 = vmax.f32 %v201, %v203
    %v208 = vmax.f32 %v202, %v204
    %v209 = vmax.f32 %v207, %v205
    %v210 = vmax.f32 %v208, %v206
    %v211 = vsub.f32 %v201, %v209
    %v212 = vsub.f32 %v202, %v210
    %v213 = vmul.f32 %v211, 1.442695
    %v214 = vpow.pop %v213
    %v215 = vmul.f32 %v212, 1.442695
    %v216 = vpow.pop %v215
    %v217 = vsub.f32 %v203, %v209
    %v218 = vsub.f32 %v204, %v210
    %v219 = vmul.f32 %v217, 1.442695
    %v220 = vpow.pop %v219
    %v221 = vmul.f32 %v218, 1.442695
    %v222 = vpow.pop %v221
    %v223 = vsub.f32 %v205, %v209
    %v224 = vsub.f32 %v206, %v210
    %v225 = vmul.f32 %v223, 1.442695
    %v226 = vpow.pop %v225
    %v227 = vmul.f32 %v224, 1.442695
    %v228 = vpow.pop %v227
    %v229 = vadd.f32 %v214, %v220
    %v230 = vadd.f32 %v216, %v222
    %v231 = vadd.f32 %v229, %v226
    %v232 = vadd.f32 %v230, %v228
    %v233 = vrcp.pop %v231
    %v234 = vrcp.pop %v232
    %v235 = vmul.f32 %v214, %v233
    %v236 = vmul.f32 %v216, %v234
    %v237 = vmul.f32 %v235, %v37
    %v238 = vmul.f32 %v236, %v38
    %v239 = vmul.f32 %v220, %v233
    %v240 = vmul.f32 %v222, %v234
    %v241 = vmul.f32 %v239, %v39
    %v242 = vmul.f32 %v240, %v40
    %v243 = vadd.f32 %v237, %v241
    %v244 = vadd.f32 %v238, %v242
    %v245 = vmul.f32 %v226, %v233
    %v246 = vmul.f32 %v228, %v234
    %v247 = vmul.f32 %v245, %v41
    %v248 = vmul.f32 %v246, %v42
    %v249 = vadd.f32 %v243, %v247
    %v250 = vadd.f32 %v244, %v248
    %v251 = vsub.f32 %v249, %v250
    %v252 = vmul.f32 %v251, %v251
    %253 = vadd.xlane.f32.xlu0 %v252
    %v254 = vpop.xlane.xlu0 %253
    %v255 = vrot.slane %v254, 4
    %v256 = vadd.f32 %v254, %v255
    %v257 = vrot.slane %v256, 2
    %v258 = vadd.f32 %v256, %v257
    %v259 = vrot.slane %v258, 1
    %v260 = vadd.f32 %v258, %v259
    %s261 = vtos %v260
    %s262 = smul.f32 %s261, 0.0009765625
    %s263 = scalar_lea.smem [#allocation3], 0
    %264 = sst [smem:[%s263]] %s262
    // Predicated region
    $region42: #{tpu_custom_call.1} parent=1 // pred_check
      _
    $region43: #{tpu_custom_call.1} parent=1 // pred_check_branch
      %266 = sbr.rel (0) target = $region45
    $region44: #{tpu_custom_call.1} parent=1 // pred_region
      %s268 = ssub.s32 16, 16
      %269 = vsyncadd [#allocation4], %s268
      %272 = dma.smem_to_hbm [#allocation3], 16, %s10, [#allocation4]
    $region45: #{tpu_custom_call.1} parent=1 // pred_fallthru
      _
    // Predicated region
    $region46: #{tpu_custom_call.1} parent=1 // pred_check
      _
    $region47: #{tpu_custom_call.1} parent=1 // pred_check_branch
      %274 = sbr.rel (0) target = $region49
    $region48: #{tpu_custom_call.1} parent=1 // pred_region
      %275 = dma.done [#allocation4], 16
    $region49: #{tpu_custom_call.1} parent=1 // pred_fallthru
      _
    %276 = sfence
    %277 = vsyncpa [#allocation4], 1

</llo_original>
